<compile_context>
chip_gen: v7x
topology: tpu7x:2x2x1
jax: 0.10.0
libtpu: 0.0.40
codegen_flags: <defaults>
</compile_context>

<pallas_src>
import jax
import jax.numpy as jnp
from jax.experimental import pallas as pl
from jax.experimental.pallas import tpu as pltpu

LN_EPS = 1e-5


def _layernorm(x, gamma, beta):
    # one-pass statistics: var = E[x^2] - E[x]^2 (clamped)
    mu = jnp.mean(x, axis=-1, keepdims=True)
    ex2 = jnp.mean(x * x, axis=-1, keepdims=True)
    var = jnp.maximum(ex2 - mu * mu, 0.0)
    return (x - mu) * jax.lax.rsqrt(var + LN_EPS) * gamma + beta


def _dot(x_f32, w_bf16):
    # bf16 MXU operands, f32 accumulation.
    return jnp.dot(x_f32.astype(jnp.bfloat16), w_bf16,
                   preferred_element_type=jnp.float32)


# --------------------------------------------------------------------------------------
# Stage 1: per-point projections (one grid step per batch element).
# --------------------------------------------------------------------------------------
def projection_kernel(feat_ref, wqkv_ref, bqkv_ref,
                      gq_ref, bqln_ref, gk_ref, bkln_ref,
                      w1_ref, b1_ref,
                      qw1_ref, kw1b_ref, v_ref):
    E = feat_ref.shape[2]
    feat = feat_ref[0]                                               # (N, E) f32

    # fused q/k/v projection: one (N, E) @ (E, 3E) MXU matmul
    qkv = _dot(feat, wqkv_ref[...]) + bqkv_ref[...]                  # (N, 3E)
    q = jnp.maximum(_layernorm(qkv[:, 0:E], gq_ref[...], bqln_ref[...]), 0.0)
    k = jnp.maximum(_layernorm(qkv[:, E:2 * E], gk_ref[...], bkln_ref[...]), 0.0)
    v_ref[0] = qkv[:, 2 * E:3 * E]

    # W1 distributed through relation_qk = k[j] - q[i]; fold b1 into the k side.
    qw1_ref[0] = _dot(q, w1_ref[...])                                # (N, E)
    kw1b_ref[0] = _dot(k, w1_ref[...]) + b1_ref[...]                 # (N, E)


# --------------------------------------------------------------------------------------
# Stage 2: relation / weighted-softmax / value contraction, tiled over query rows.
# --------------------------------------------------------------------------------------
def attention_kernel(qw1_ref, kw1b_ref, v_ref, d_ref, drow_ref,
                     gwe_ref, bwe_ref, w2_ref, b2_ref, o_ref):
    TI, E = qw1_ref.shape[1], qw1_ref.shape[2]
    N = kw1b_ref.shape[1]

    qw1 = qw1_ref[0]                    # (TI, E)  q@W1 for this row tile
    kw1b = kw1b_ref[0]                  # (N, E)   k@W1 + b1 (all j)
    v = v_ref[0]                        # (N, E)
    d = d_ref[0]                        # (N, 1)   distribution over j
    d_i = drow_ref[0]                   # (TI, 1)  distribution for these rows (mask)

    # h[i, j] = relu(LN(k@W1[j] - q@W1[i] + b1))       (b1 already folded into kw1b)
    pre = kw1b[None, :, :] - qw1[:, None, :]                         # (TI, N, E)
    h = jnp.maximum(_layernorm(pre, gwe_ref[...], bwe_ref[...]), 0.0)

    # weight_encoding second Linear: (TI*N, E) @ (E, E) on the MXU
    w = (_dot(h.reshape(TI * N, E), w2_ref[...]) + b2_ref[...]).reshape(TI, N, E)

    # weighted softmax over j (dim=-2), weights = distribution_j
    w_max = jnp.max(w, axis=1, keepdims=True)                        # (TI, 1, E)
    e = jnp.exp(w - w_max) * d[None, :, :]                           # (TI, N, E); carries d_j
    denom = jnp.sum(e, axis=1)                                       # (TI, E)
    num = jnp.sum(e * v[None, :, :], axis=1)                         # (TI, E)

    # deferred division + d_i > 0 row mask (d_j part is already in the weight factor)
    out = num * pl.reciprocal(denom, approx=True)
    o_ref[0] = jnp.where(d_i > 0.0, out, 0.0)


# --------------------------------------------------------------------------------------
# Parameters / wrapper.
# --------------------------------------------------------------------------------------
def init_params(key, embed_channels):
    """Freshly constructed VectorAttention (Linear default init, LN gamma=1/beta=0).
    Linear weights are stored pre-transposed as (in, out)."""
    E = embed_channels
    keys = jax.random.split(key, 10)
    it = iter(keys)
    bound = 1.0 / (E ** 0.5)

    def u(shape):
        return jax.random.uniform(next(it), shape, jnp.float32, -bound, bound)

    return dict(
        wq=u((E, E)), bq=u((1, E)),
        gq=jnp.ones((1, E), jnp.float32), bq_ln=jnp.zeros((1, E), jnp.float32),
        wk=u((E, E)), bk=u((1, E)),
        gk=jnp.ones((1, E), jnp.float32), bk_ln=jnp.zeros((1, E), jnp.float32),
        wv=u((E, E)), bv=u((1, E)),
        w1=u((E, E)), b1=u((1, E)),
        gwe=jnp.ones((1, E), jnp.float32), bwe=jnp.zeros((1, E), jnp.float32),
        w2=u((E, E)), b2=u((1, E)),
    )


def _choose_row_tile(N, E):
    """Largest query-row tile TI (divisor of N, multiple of 8 or == N) such that the
    ~5 live (TI, N, E) f32 intermediates stay within ~20 MiB."""
    budget = 20 * 1024 * 1024
    cap = max(8, budget // (5 * 4 * N * E))
    cap = min(cap, N, 512)
    for t in range(int(cap), 0, -1):
        if N % t == 0 and (t % 8 == 0 or t == N):
            return t
    return N


def vector_attention(feat, distribution, params):
    """feat: (B, N, E) f32, distribution: (B, N, 1) f32  ->  (B, N, E) f32."""
    B, N, E = feat.shape
    f32 = jnp.float32

    # Pre-fuse / pre-transpose weights outside the kernel; MXU operands as bf16.
    wqkv = jnp.concatenate([params['wq'], params['wk'], params['wv']], axis=1)
    wqkv = wqkv.astype(jnp.bfloat16)                                            # (E, 3E)
    bqkv = jnp.concatenate([params['bq'], params['bk'], params['bv']], axis=1)  # (1, 3E)
    w1 = params['w1'].astype(jnp.bfloat16)
    w2 = params['w2'].astype(jnp.bfloat16)

    def rep1(shape):   # batch-invariant operand for the 1-D grid
        return pl.BlockSpec(shape, lambda b: (0,) * len(shape))

    def rep2(shape):   # invariant operand for the 2-D grid
        return pl.BlockSpec(shape, lambda b, i: (0,) * len(shape))

    # ---------------- stage 1: projections, grid=(B,) ------------------------------
    proj_spec = pltpu.PrefetchScalarGridSpec(
        num_scalar_prefetch=0,
        grid=(B,),
        in_specs=[
            pl.BlockSpec((1, N, E), lambda b: (b, 0, 0)),   # feat
            rep1((E, 3 * E)), rep1((1, 3 * E)),             # fused q/k/v weight + bias
            rep1((1, E)), rep1((1, E)),                     # linear_q LayerNorm gamma/beta
            rep1((1, E)), rep1((1, E)),                     # linear_k LayerNorm gamma/beta
            rep1((E, E)), rep1((1, E)),                     # weight_encoding Linear 1 (W1, b1)
        ],
        out_specs=[pl.BlockSpec((1, N, E), lambda b: (b, 0, 0))] * 3,
    )
    proj_cost = pl.CostEstimate(
        flops=int(B * (2 * N * E * 3 * E + 2 * 2 * N * E * E + 16 * N * E)),
        transcendentals=int(B * 2 * N),
        bytes_accessed=int(4 * (feat.size + 3 * B * N * E + 8 * E)
                           + 2 * (wqkv.size + w1.size)),
    )
    qw1, kw1b, v = pl.pallas_call(
        projection_kernel,
        grid_spec=proj_spec,
        out_shape=(jax.ShapeDtypeStruct((B, N, E), f32),
                   jax.ShapeDtypeStruct((B, N, E), f32),
                   jax.ShapeDtypeStruct((B, N, E), f32)),
        compiler_params=pltpu.CompilerParams(dimension_semantics=("parallel",)),
        cost_estimate=proj_cost,
    )(feat, wqkv, bqkv,
      params['gq'], params['bq_ln'], params['gk'], params['bk_ln'],
      w1, params['b1'])

    # ---------------- stage 2: relation / softmax / contraction, grid=(B, N//TI) ----
    TI = _choose_row_tile(N, E)
    n_i = N // TI

    attn_spec = pltpu.PrefetchScalarGridSpec(
        num_scalar_prefetch=0,
        grid=(B, n_i),
        in_specs=[
            pl.BlockSpec((1, TI, E), lambda b, i: (b, i, 0)),   # q@W1 rows of this tile
            pl.BlockSpec((1, N, E), lambda b, i: (b, 0, 0)),    # k@W1 + b1 (all j)
            pl.BlockSpec((1, N, E), lambda b, i: (b, 0, 0)),    # value (all j)
            pl.BlockSpec((1, N, 1), lambda b, i: (b, 0, 0)),    # distribution over j
            pl.BlockSpec((1, TI, 1), lambda b, i: (b, i, 0)),   # distribution rows (mask)
            rep2((1, E)), rep2((1, E)),                         # weight_encoding LayerNorm
            rep2((E, E)), rep2((1, E)),                         # weight_encoding Linear 2
        ],
        out_specs=pl.BlockSpec((1, TI, E), lambda b, i: (b, i, 0)),
    )

    # VMEM budget derived from the tile (instead of a hard-coded cap); fits v7x's 64 MiB.
    live_bytes = 5 * 4 * TI * N * E                                   # (TI,N,E) f32 temps
    block_bytes = 2 * 4 * (2 * TI * E + 2 * N * E + N + TI)           # double-buffered blocks
    weight_bytes = 2 * E * E + 5 * 4 * E
    vmem_limit = int(max(32 * 1024 * 1024,
                         min(64 * 1024 * 1024,
                             2 * (live_bytes + block_bytes + weight_bytes))))

    attn_cost = pl.CostEstimate(
        flops=int(B * (2 * N * N * E * E + 10 * N * N * E)),
        transcendentals=int(B * (N * N * E + N * E)),
        bytes_accessed=int(4 * (4 * B * N * E + 2 * B * N) + 2 * E * E + 4 * 4 * E),
    )

    out = pl.pallas_call(
        attention_kernel,
        grid_spec=attn_spec,
        out_shape=jax.ShapeDtypeStruct((B, N, E), f32),
        compiler_params=pltpu.CompilerParams(
            dimension_semantics=("parallel", "parallel"),
            vmem_limit_bytes=vmem_limit,
        ),
        cost_estimate=attn_cost,
    )(qw1, kw1b, v, distribution, distribution,
      params['gwe'], params['bwe'], w2, params['b2'])
    return out


def vector_attention_reference(feat, distribution, params):
    """Pure-JAX float32 reference of VectorAttention.forward."""
    def ln(x, g, b):
        mu = jnp.mean(x, axis=-1, keepdims=True)
        var = jnp.mean((x - mu) ** 2, axis=-1, keepdims=True)
        return (x - mu) / jnp.sqrt(var + LN_EPS) * g + b

    relu = lambda x: jnp.maximum(x, 0.0)
    q = relu(ln(feat @ params['wq'] + params['bq'], params['gq'], params['bq_ln']))
    k = relu(ln(feat @ params['wk'] + params['bk'], params['gk'], params['bk_ln']))
    v = feat @ params['wv'] + params['bv']
    rel = k[:, None, :, :] - q[:, :, None, :]                         # (B, N, N, E)
    h = relu(ln(rel @ params['w1'] + params['b1'], params['gwe'], params['bwe']))
    w = h @ params['w2'] + params['b2']
    maxes = jnp.max(w, axis=-2, keepdims=True)
    x_exp = jnp.exp(w - maxes) * distribution[:, None, :, :]          # weighted_softmax
    probs = x_exp / jnp.sum(x_exp, axis=-2, keepdims=True)
    mask = (distribution * jnp.swapaxes(distribution, -1, -2)) > 0    # (B, N, N)
    weight = probs * mask[..., None]
    return jnp.einsum('bijk,bjk->bik', weight, v)


if __name__ == "__main__":
    B, N, E = 2, 8, 32
    key = jax.random.PRNGKey(0)
    kf, kd, kp = jax.random.split(key, 3)

    feat = jax.random.normal(kf, (B, N, E), dtype=jnp.float32)
    distribution = jax.random.uniform(kd, (B, N, 1), dtype=jnp.float32)
    # zero a couple of points per set so the mask and dist-weighted softmax paths are exercised
    distribution = distribution.at[:, -2:, :].set(0.0)

    params = init_params(kp, E)

    out = vector_attention(feat, distribution, params)
    out = jax.block_until_ready(out)

    assert out.shape == (B, N, E) and out.dtype == jnp.float32
    assert bool(jnp.all(jnp.isfinite(out)))

    # loose tolerance: kernel uses bf16 MXU operands + approx reciprocal (f32 accumulation)
    ref = vector_attention_reference(feat, distribution, params)
    max_err = float(jnp.max(jnp.abs(out - ref)))
    assert max_err < 2e-1, f"max abs error vs reference: {max_err}"

    print("KERNEL_OK")
</pallas_src>

<mosaic_0001>
module attributes {stable_mosaic.version = 11 : i64} {
  func.func @projection_kernel(%arg0: i32, %arg1: memref<1x8x32xf32, #tpu.memory_space<vmem>>, %arg2: memref<32x96xbf16, #tpu.memory_space<vmem>>, %arg3: memref<1x96xf32, #tpu.memory_space<vmem>>, %arg4: memref<1x32xf32, #tpu.memory_space<vmem>>, %arg5: memref<1x32xf32, #tpu.memory_space<vmem>>, %arg6: memref<1x32xf32, #tpu.memory_space<vmem>>, %arg7: memref<1x32xf32, #tpu.memory_space<vmem>>, %arg8: memref<32x32xbf16, #tpu.memory_space<vmem>>, %arg9: memref<1x32xf32, #tpu.memory_space<vmem>>, %arg10: memref<1x8x32xf32, #tpu.memory_space<vmem>>, %arg11: memref<1x8x32xf32, #tpu.memory_space<vmem>>, %arg12: memref<1x8x32xf32, #tpu.memory_space<vmem>>) attributes {dimension_semantics = [#tpu.dimension_semantics<parallel>], iteration_bounds = array<i64: 2>, scalar_prefetch = 0 : i64, scratch_operands = 0 : i64, tpu.core_type = #tpu.core_type<tc>, window_params = [{transform_indices = @transform_0, window_bounds = array<i64: 1, 8, 32>}, {pipeline_mode = #tpu.pipeline_mode<synchronous>, transform_indices = @transform_1, window_bounds = array<i64: 32, 96>}, {pipeline_mode = #tpu.pipeline_mode<synchronous>, transform_indices = @transform_2, window_bounds = array<i64: 1, 96>}, {pipeline_mode = #tpu.pipeline_mode<synchronous>, transform_indices = @transform_3, window_bounds = array<i64: 1, 32>}, {pipeline_mode = #tpu.pipeline_mode<synchronous>, transform_indices = @transform_4, window_bounds = array<i64: 1, 32>}, {pipeline_mode = #tpu.pipeline_mode<synchronous>, transform_indices = @transform_5, window_bounds = array<i64: 1, 32>}, {pipeline_mode = #tpu.pipeline_mode<synchronous>, transform_indices = @transform_6, window_bounds = array<i64: 1, 32>}, {pipeline_mode = #tpu.pipeline_mode<synchronous>, transform_indices = @transform_7, window_bounds = array<i64: 32, 32>}, {pipeline_mode = #tpu.pipeline_mode<synchronous>, transform_indices = @transform_8, window_bounds = array<i64: 1, 32>}, {transform_indices = @transform_9, window_bounds = array<i64: 1, 8, 32>}, {transform_indices = @transform_10, window_bounds = array<i64: 1, 8, 32>}, {transform_indices = @transform_11, window_bounds = array<i64: 1, 8, 32>}]} {
    %c0 = arith.constant 0 : index
    %c0_0 = arith.constant 0 : index
    %c0_1 = arith.constant 0 : index
    %0 = vector.load %arg1[%c0, %c0_0, %c0_1] : memref<1x8x32xf32, #tpu.memory_space<vmem>>, vector<1x8x32xf32>
    %1 = vector.shape_cast %0 : vector<1x8x32xf32> to vector<8x32xf32>
    %c0_2 = arith.constant 0 : index
    %c0_3 = arith.constant 0 : index
    %2 = vector.load %arg2[%c0_2, %c0_3] : memref<32x96xbf16, #tpu.memory_space<vmem>>, vector<32x96xbf16>
    %3 = arith.truncf %1 : vector<8x32xf32> to vector<8x32xbf16>
    %cst = arith.constant dense<0.000000e+00> : vector<8x96xf32>
    %4 = tpu.matmul %3, %2, %cst {dimension_numbers = #tpu.dot_dimension_numbers<[1], [0], [0], [1], [0, 0, 1, 1], [], []>} : vector<8x32xbf16>, vector<32x96xbf16>, vector<8x96xf32> -> vector<8x96xf32>
    %c0_4 = arith.constant 0 : index
    %c0_5 = arith.constant 0 : index
    %5 = vector.load %arg3[%c0_4, %c0_5] : memref<1x96xf32, #tpu.memory_space<vmem>>, vector<1x96xf32>
    %6 = vector.broadcast %5 : vector<1x96xf32> to vector<8x96xf32>
    %7 = arith.addf %4, %6 : vector<8x96xf32>
    %8 = vector.extract_strided_slice %7 {offsets = [0, 0], sizes = [8, 32], strides = [1, 1]} : vector<8x96xf32> to vector<8x32xf32>
    %c0_6 = arith.constant 0 : index
    %c0_7 = arith.constant 0 : index
    %9 = vector.load %arg4[%c0_6, %c0_7] : memref<1x32xf32, #tpu.memory_space<vmem>>, vector<1x32xf32>
    %c0_8 = arith.constant 0 : index
    %c0_9 = arith.constant 0 : index
    %10 = vector.load %arg5[%c0_8, %c0_9] : memref<1x32xf32, #tpu.memory_space<vmem>>, vector<1x32xf32>
    %cst_10 = arith.constant dense<0.000000e+00> : vector<8xf32>
    %11 = vector.multi_reduction <add>, %8, %cst_10 [1] : vector<8x32xf32> to vector<8xf32>
    %12 = vector.shape_cast %11 : vector<8xf32> to vector<8x1xf32>
    %cst_11 = arith.constant 3.200000e+01 : f32
    %13 = vector.broadcast %cst_11 : f32 to vector<8x1xf32>
    %14 = arith.divf %12, %13 : vector<8x1xf32>
    %15 = arith.mulf %8, %8 : vector<8x32xf32>
    %cst_12 = arith.constant dense<0.000000e+00> : vector<8xf32>
    %16 = vector.multi_reduction <add>, %15, %cst_12 [1] : vector<8x32xf32> to vector<8xf32>
    %17 = vector.shape_cast %16 : vector<8xf32> to vector<8x1xf32>
    %cst_13 = arith.constant 3.200000e+01 : f32
    %18 = vector.broadcast %cst_13 : f32 to vector<8x1xf32>
    %19 = arith.divf %17, %18 : vector<8x1xf32>
    %20 = arith.mulf %14, %14 : vector<8x1xf32>
    %21 = arith.subf %19, %20 : vector<8x1xf32>
    %cst_14 = arith.constant 0.000000e+00 : f32
    %22 = vector.broadcast %cst_14 : f32 to vector<8x1xf32>
    %23 = arith.maximumf %21, %22 : vector<8x1xf32>
    %24 = vector.broadcast %14 : vector<8x1xf32> to vector<8x32xf32>
    %25 = arith.subf %8, %24 : vector<8x32xf32>
    %cst_15 = arith.constant 9.99999974E-6 : f32
    %26 = vector.broadcast %cst_15 : f32 to vector<8x1xf32>
    %27 = arith.addf %23, %26 : vector<8x1xf32>
    %28 = math.rsqrt %27 : vector<8x1xf32>
    %29 = vector.broadcast %28 : vector<8x1xf32> to vector<8x32xf32>
    %30 = arith.mulf %25, %29 : vector<8x32xf32>
    %31 = vector.broadcast %9 : vector<1x32xf32> to vector<8x32xf32>
    %32 = arith.mulf %30, %31 : vector<8x32xf32>
    %33 = vector.broadcast %10 : vector<1x32xf32> to vector<8x32xf32>
    %34 = arith.addf %32, %33 : vector<8x32xf32>
    %cst_16 = arith.constant 0.000000e+00 : f32
    %35 = vector.broadcast %cst_16 : f32 to vector<8x32xf32>
    %36 = arith.maximumf %34, %35 : vector<8x32xf32>
    %37 = vector.extract_strided_slice %7 {offsets = [0, 32], sizes = [8, 32], strides = [1, 1]} : vector<8x96xf32> to vector<8x32xf32>
    %c0_17 = arith.constant 0 : index
    %c0_18 = arith.constant 0 : index
    %38 = vector.load %arg6[%c0_17, %c0_18] : memref<1x32xf32, #tpu.memory_space<vmem>>, vector<1x32xf32>
    %c0_19 = arith.constant 0 : index
    %c0_20 = arith.constant 0 : index
    %39 = vector.load %arg7[%c0_19, %c0_20] : memref<1x32xf32, #tpu.memory_space<vmem>>, vector<1x32xf32>
    %cst_21 = arith.constant dense<0.000000e+00> : vector<8xf32>
    %40 = vector.multi_reduction <add>, %37, %cst_21 [1] : vector<8x32xf32> to vector<8xf32>
    %41 = vector.shape_cast %40 : vector<8xf32> to vector<8x1xf32>
    %cst_22 = arith.constant 3.200000e+01 : f32
    %42 = vector.broadcast %cst_22 : f32 to vector<8x1xf32>
    %43 = arith.divf %41, %42 : vector<8x1xf32>
    %44 = arith.mulf %37, %37 : vector<8x32xf32>
    %cst_23 = arith.constant dense<0.000000e+00> : vector<8xf32>
    %45 = vector.multi_reduction <add>, %44, %cst_23 [1] : vector<8x32xf32> to vector<8xf32>
    %46 = vector.shape_cast %45 : vector<8xf32> to vector<8x1xf32>
    %cst_24 = arith.constant 3.200000e+01 : f32
    %47 = vector.broadcast %cst_24 : f32 to vector<8x1xf32>
    %48 = arith.divf %46, %47 : vector<8x1xf32>
    %49 = arith.mulf %43, %43 : vector<8x1xf32>
    %50 = arith.subf %48, %49 : vector<8x1xf32>
    %cst_25 = arith.constant 0.000000e+00 : f32
    %51 = vector.broadcast %cst_25 : f32 to vector<8x1xf32>
    %52 = arith.maximumf %50, %51 : vector<8x1xf32>
    %53 = vector.broadcast %43 : vector<8x1xf32> to vector<8x32xf32>
    %54 = arith.subf %37, %53 : vector<8x32xf32>
    %cst_26 = arith.constant 9.99999974E-6 : f32
    %55 = vector.broadcast %cst_26 : f32 to vector<8x1xf32>
    %56 = arith.addf %52, %55 : vector<8x1xf32>
    %57 = math.rsqrt %56 : vector<8x1xf32>
    %58 = vector.broadcast %57 : vector<8x1xf32> to vector<8x32xf32>
    %59 = arith.mulf %54, %58 : vector<8x32xf32>
    %60 = vector.broadcast %38 : vector<1x32xf32> to vector<8x32xf32>
    %61 = arith.mulf %59, %60 : vector<8x32xf32>
    %62 = vector.broadcast %39 : vector<1x32xf32> to vector<8x32xf32>
    %63 = arith.addf %61, %62 : vector<8x32xf32>
    %cst_27 = arith.constant 0.000000e+00 : f32
    %64 = vector.broadcast %cst_27 : f32 to vector<8x32xf32>
    %65 = arith.maximumf %63, %64 : vector<8x32xf32>
    %66 = vector.extract_strided_slice %7 {offsets = [0, 64], sizes = [8, 32], strides = [1, 1]} : vector<8x96xf32> to vector<8x32xf32>
    %c0_28 = arith.constant 0 : index
    %c0_29 = arith.constant 0 : index
    %c0_30 = arith.constant 0 : index
    %67 = vector.load %arg12[%c0_28, %c0_29, %c0_30] : memref<1x8x32xf32, #tpu.memory_space<vmem>>, vector<1x8x32xf32>
    %68 = vector.shape_cast %67 : vector<1x8x32xf32> to vector<8x32xf32>
    %69 = vector.shape_cast %66 : vector<8x32xf32> to vector<1x8x32xf32>
    tpu.vector_store %arg12[%c0_28, %c0_29, %c0_30], %69 {strides = array<i32>} : memref<1x8x32xf32, #tpu.memory_space<vmem>>, vector<1x8x32xf32>,
    %c0_31 = arith.constant 0 : index
    %c0_32 = arith.constant 0 : index
    %70 = vector.load %arg8[%c0_31, %c0_32] : memref<32x32xbf16, #tpu.memory_space<vmem>>, vector<32x32xbf16>
    %71 = arith.truncf %36 : vector<8x32xf32> to vector<8x32xbf16>
    %cst_33 = arith.constant dense<0.000000e+00> : vector<8x32xf32>
    %72 = tpu.matmul %71, %70, %cst_33 {dimension_numbers = #tpu.dot_dimension_numbers<[1], [0], [0], [1], [0, 0, 1, 1], [], []>} : vector<8x32xbf16>, vector<32x32xbf16>, vector<8x32xf32> -> vector<8x32xf32>
    %c0_34 = arith.constant 0 : index
    %c0_35 = arith.constant 0 : index
    %c0_36 = arith.constant 0 : index
    %73 = vector.load %arg10[%c0_34, %c0_35, %c0_36] : memref<1x8x32xf32, #tpu.memory_space<vmem>>, vector<1x8x32xf32>
    %74 = vector.shape_cast %73 : vector<1x8x32xf32> to vector<8x32xf32>
    %75 = vector.shape_cast %72 : vector<8x32xf32> to vector<1x8x32xf32>
    tpu.vector_store %arg10[%c0_34, %c0_35, %c0_36], %75 {strides = array<i32>} : memref<1x8x32xf32, #tpu.memory_space<vmem>>, vector<1x8x32xf32>,
    %c0_37 = arith.constant 0 : index
    %c0_38 = arith.constant 0 : index
    %76 = vector.load %arg8[%c0_37, %c0_38] : memref<32x32xbf16, #tpu.memory_space<vmem>>, vector<32x32xbf16>
    %77 = arith.truncf %65 : vector<8x32xf32> to vector<8x32xbf16>
    %cst_39 = arith.constant dense<0.000000e+00> : vector<8x32xf32>
    %78 = tpu.matmul %77, %76, %cst_39 {dimension_numbers = #tpu.dot_dimension_numbers<[1], [0], [0], [1], [0, 0, 1, 1], [], []>} : vector<8x32xbf16>, vector<32x32xbf16>, vector<8x32xf32> -> vector<8x32xf32>
    %c0_40 = arith.constant 0 : index
    %c0_41 = arith.constant 0 : index
    %79 = vector.load %arg9[%c0_40, %c0_41] : memref<1x32xf32, #tpu.memory_space<vmem>>, vector<1x32xf32>
    %80 = vector.broadcast %79 : vector<1x32xf32> to vector<8x32xf32>
    %81 = arith.addf %78, %80 : vector<8x32xf32>
    %c0_42 = arith.constant 0 : index
    %c0_43 = arith.constant 0 : index
    %c0_44 = arith.constant 0 : index
    %82 = vector.load %arg11[%c0_42, %c0_43, %c0_44] : memref<1x8x32xf32, #tpu.memory_space<vmem>>, vector<1x8x32xf32>
    %83 = vector.shape_cast %82 : vector<1x8x32xf32> to vector<8x32xf32>
    %84 = vector.shape_cast %81 : vector<8x32xf32> to vector<1x8x32xf32>
    tpu.vector_store %arg11[%c0_42, %c0_43, %c0_44], %84 {strides = array<i32>} : memref<1x8x32xf32, #tpu.memory_space<vmem>>, vector<1x8x32xf32>,
    return
  }
  func.func @transform_0(%arg0: i32) -> (i32, i32, i32) {
    %c0_i32 = arith.constant 0 : i32
    %c0_i32_0 = arith.constant 0 : i32
    %c0_i32_1 = arith.constant 0 : i32
    return %arg0, %c0_i32, %c0_i32_0 : i32, i32, i32
  }
  func.func @transform_1(%arg0: i32) -> (i32, i32) {
    %c0_i32 = arith.constant 0 : i32
    %c0_i32_0 = arith.constant 0 : i32
    %c0_i32_1 = arith.constant 0 : i32
    return %c0_i32, %c0_i32_0 : i32, i32
  }
  func.func @transform_2(%arg0: i32) -> (i32, i32) {
    %c0_i32 = arith.constant 0 : i32
    %c0_i32_0 = arith.constant 0 : i32
    %c0_i32_1 = arith.constant 0 : i32
    return %c0_i32, %c0_i32_0 : i32, i32
  }
  func.func @transform_3(%arg0: i32) -> (i32, i32) {
    %c0_i32 = arith.constant 0 : i32
    %c0_i32_0 = arith.constant 0 : i32
    %c0_i32_1 = arith.constant 0 : i32
    return %c0_i32, %c0_i32_0 : i32, i32
  }
  func.func @transform_4(%arg0: i32) -> (i32, i32) {
    %c0_i32 = arith.constant 0 : i32
    %c0_i32_0 = arith.constant 0 : i32
    %c0_i32_1 = arith.constant 0 : i32
    return %c0_i32, %c0_i32_0 : i32, i32
  }
  func.func @transform_5(%arg0: i32) -> (i32, i32) {
    %c0_i32 = arith.constant 0 : i32
    %c0_i32_0 = arith.constant 0 : i32
    %c0_i32_1 = arith.constant 0 : i32
    return %c0_i32, %c0_i32_0 : i32, i32
  }
  func.func @transform_6(%arg0: i32) -> (i32, i32) {
    %c0_i32 = arith.constant 0 : i32
    %c0_i32_0 = arith.constant 0 : i32
    %c0_i32_1 = arith.constant 0 : i32
    return %c0_i32, %c0_i32_0 : i32, i32
  }
  func.func @transform_7(%arg0: i32) -> (i32, i32) {
    %c0_i32 = arith.constant 0 : i32
    %c0_i32_0 = arith.constant 0 : i32
    %c0_i32_1 = arith.constant 0 : i32
    return %c0_i32, %c0_i32_0 : i32, i32
  }
  func.func @transform_8(%arg0: i32) -> (i32, i32) {
    %c0_i32 = arith.constant 0 : i32
    %c0_i32_0 = arith.constant 0 : i32
    %c0_i32_1 = arith.constant 0 : i32
    return %c0_i32, %c0_i32_0 : i32, i32
  }
  func.func @transform_9(%arg0: i32) -> (i32, i32, i32) {
    %c0_i32 = arith.constant 0 : i32
    %c0_i32_0 = arith.constant 0 : i32
    %c0_i32_1 = arith.constant 0 : i32
    return %arg0, %c0_i32, %c0_i32_0 : i32, i32, i32
  }
  func.func @transform_10(%arg0: i32) -> (i32, i32, i32) {
    %c0_i32 = arith.constant 0 : i32
    %c0_i32_0 = arith.constant 0 : i32
    %c0_i32_1 = arith.constant 0 : i32
    return %arg0, %c0_i32, %c0_i32_0 : i32, i32, i32
  }
  func.func @transform_11(%arg0: i32) -> (i32, i32, i32) {
    %c0_i32 = arith.constant 0 : i32
    %c0_i32_0 = arith.constant 0 : i32
    %c0_i32_1 = arith.constant 0 : i32
    return %arg0, %c0_i32, %c0_i32_0 : i32, i32, i32
  }
}

</mosaic_0001>

<llo_original>
// kernel: tpu_custom_call.1
$region0: #{tpu_custom_call.1}
  #allocation0 [shape = 'u32[]', space=smem, size = 0x4, offset = 0x4, fixed_abs, tag = 'smem constant byte address 0x4 - core index']
  #allocation1 [shape = 'u32[144,128]{1,0:T(1,128)}', space=vmem, size = 0x12000, scoped, tag = 'internal scratch']
  %s0 = inlined_call_operand.hbm [shape: f32[2,8,32], index: 0, kind: input, shape index: {}]
  %s1 = inlined_call_operand.hbm [shape: bf16[32,96], index: 1, kind: input, shape index: {}]
  %s2 = inlined_call_operand.vmem [shape: f32[1,96], index: 2, kind: input, shape index: {}]
  %s3 = inlined_call_operand.vmem [shape: f32[1,32], index: 3, kind: input, shape index: {}]
  %s4 = inlined_call_operand.vmem [shape: f32[1,32], index: 4, kind: input, shape index: {}]
  %s5 = inlined_call_operand.vmem [shape: f32[1,32], index: 5, kind: input, shape index: {}]
  %s6 = inlined_call_operand.vmem [shape: f32[1,32], index: 6, kind: input, shape index: {}]
  %s7 = inlined_call_operand.vmem [shape: bf16[32,32], index: 7, kind: input, shape index: {}]
  %s8 = inlined_call_operand.vmem [shape: f32[1,32], index: 8, kind: input, shape index: {}]
  %s9 = inlined_call_operand.hbm [shape: f32[2,8,32], index: 9, kind: output, shape index: {0}]
  %s10 = inlined_call_operand.hbm [shape: f32[2,8,32], index: 10, kind: output, shape index: {1}]
  %s11 = inlined_call_operand.hbm [shape: f32[2,8,32], index: 11, kind: output, shape index: {2}]
  %12 = xla_tuple %s9, %s10, %s11
  %s13 = sld [smem:[#allocation0]]
  $region93: #{tpu_custom_call.1} parent=0
    _
  %s15 = ssub.s32 1, %s13
  %s16 = scalar_select 0, %s15, %s13
  $region1: #{tpu_custom_call.1} parent=0
    #allocation2 [shape = 'u8[8192]{0}', space=vmem, size = 0x2000, scoped, tag = 'input window, operand 0']
    #allocation3 [shape = 's32[2]{0}', space=sflag, size = 0x8, scoped, tag = 'scoped memory for tpu_custom_call.1']
    #allocation4 [shape = 's32[2]{0}', space=sflag, size = 0x8, scoped, tag = 'scoped memory for tpu_custom_call.1']
    #allocation5 [shape = 'u8[8192]{0}', space=vmem, size = 0x2000, scoped, tag = 'input window, operand 1, single buffered']
    #allocation6 [shape = 's32[1]{0}', space=sflag, size = 0x4, scoped, tag = 'scoped memory for tpu_custom_call.1']
    #allocation7 [shape = 'u8[8192]{0}', space=vmem, size = 0x2000, scoped, tag = 'output window, operand 0']
    #allocation8 [shape = 'u8[8192]{0}', space=vmem, size = 0x2000, scoped, tag = 'output window, operand 1']
    #allocation9 [shape = 's32[2]{0}', space=sflag, size = 0x8, scoped, tag = 'scoped memory for tpu_custom_call.1']
    #allocation10 [shape = 'u8[8192]{0}', space=vmem, size = 0x2000, scoped, tag = 'output window, operand 2']
    %17 = vsyncpa [#allocation3], 0
    %s18 = scalar_lea.sflag [#allocation3], 1
    %19 = vsyncpa %s18, 0
    %20 = vsyncpa [#allocation6], 0
    %21 = vsyncpa [#allocation4], 0
    %s22 = scalar_lea.sflag [#allocation4], 1
    %23 = vsyncpa %s22, 0
    %24 = vsyncpa [#allocation9], 0
    %s25 = scalar_lea.sflag [#allocation9], 1
    %26 = vsyncpa %s25, 0
    loop: start=0, step=1, limit=4
    $region2: #{tpu_custom_call.1} parent=1 // loop_pre_header
      _
    $region3: #{tpu_custom_call.1} parent=1 // loop_header
      %s28 = sphi 0, %s32
      %p29 = scmp.ge.s32.totalorder %s28, 4
      %s38 = sphi 0, %s40
      %s41 = sphi 0, %s38
      %s42 = sphi 0, %s41
      %s58 = sphi 0, %s42
      %s62 = sphi 0, %s62
      %s64 = sphi 0, %s62
      %s65 = sphi 0, %s64
      %s79 = sphi 0, %s65
      %s83 = sphi 0, %s83
      %s85 = sphi 0, %s83
      %s86 = sphi 0, %s85
      %s100 = sphi 0, %s86
      %s104 = sphi 0, %s104
      %s106 = sphi 0, %s104
      %s107 = sphi 0, %s106
      %s121 = sphi 0, %s107
      %s125 = sphi 0, %s125
      %s127 = sphi 0, %s125
      %s128 = sphi 0, %s127
      %s142 = sphi 0, %s128
      %s146 = sphi 0, %s146
      %s148 = sphi 0, %s146
      %s149 = sphi 0, %s148
      %s163 = sphi 0, %s149
      %s167 = sphi 0, %s167
      %s169 = sphi 0, %s167
      %s170 = sphi 0, %s169
      %s184 = sphi 0, %s170
      %s188 = sphi 0, %s188
      %s190 = sphi 0, %s188
      %s191 = sphi 0, %s190
      %s205 = sphi 0, %s191
      %s209 = sphi 0, %s209
      %s211 = sphi 0, %s209
      %s212 = sphi 0, %s211
      %s226 = sphi 0, %s212
      %s232 = sphi 0, %s234
      %s235 = sphi 0, %s232
      %s236 = sphi 0, %s235
      %s252 = sphi 0, %s236
      %s258 = sphi 0, %s260
      %s261 = sphi 0, %s258
      %s262 = sphi 0, %s261
      %s278 = sphi 0, %s262
      %s284 = sphi 0, %s286
      %s287 = sphi 0, %s284
      %s288 = sphi 0, %s287
      %s304 = sphi 0, %s288
    $region4: #{tpu_custom_call.1} parent=1 // loop_header_branch
      %31 = sbr.rel (%p29) target = $region8
    $region5: #{tpu_custom_call.1} parent=1 // loop_body
      %s33 = ssub.s32 %s28, 1
      %s34 = ssub.s32 %s28, 2
      %s35 = sadd.s32 %s28, 1
      %s36 = ssub.s32 %s28, %s35
      %p37 = scmp.eq.s32.totalorder %s36, 0
      %s39 = sadd.s32 %s38, 1
      %s40 = scalar_select %p37, %s38, %s39
      %p43 = pneg %p37
      %p44 = scmp.eq.s32.totalorder %s28, 1
      %p45 = por %p43, %p44
      %p46 = scmp.ne.s32.totalorder %s38, %s41
      %p47 = scmp.eq.s32.totalorder %s28, 0
      %p48 = por %p46, %p47
      %p49 = scmp.ne.s32.totalorder %s38, %s41
      %p50 = scmp.eq.s32.totalorder %s33, 1
      %p51 = por %p49, %p50
      %p52 = scmp.ne.s32.totalorder %s41, %s42
      %p53 = scmp.eq.s32.totalorder %s33, 0
      %p54 = por %p52, %p53
      %p55 = scmp.ne.s32.totalorder %s41, %s42
      %p56 = scmp.eq.s32.totalorder %s34, 1
      %p57 = por %p55, %p56
      %p59 = scmp.ne.s32.totalorder %s42, %s58
      %p60 = scmp.eq.s32.totalorder %s34, 0
      %p61 = por %p59, %p60
      %s63 = sadd.s32 %s62, 1
      %p66 = scmp.eq.s32.totalorder %s28, 1
      %p67 = scmp.ne.s32.totalorder %s62, %s64
      %p68 = scmp.eq.s32.totalorder %s28, 0
      %p69 = por %p67, %p68
      %p70 = scmp.ne.s32.totalorder %s62, %s64
      %p71 = scmp.eq.s32.totalorder %s33, 1
      %p72 = por %p70, %p71
      %p73 = scmp.ne.s32.totalorder %s64, %s65
      %p74 = scmp.eq.s32.totalorder %s33, 0
      %p75 = por %p73, %p74
      %p76 = scmp.ne.s32.totalorder %s64, %s65
      %p77 = scmp.eq.s32.totalorder %s34, 1
      %p78 = por %p76, %p77
      %p80 = scmp.ne.s32.totalorder %s65, %s79
      %p81 = scmp.eq.s32.totalorder %s34, 0
      %p82 = por %p80, %p81
      %s84 = sadd.s32 %s83, 1
      %p87 = scmp.eq.s32.totalorder %s28, 1
      %p88 = scmp.ne.s32.totalorder %s83, %s85
      %p89 = scmp.eq.s32.totalorder %s28, 0
      %p90 = por %p88, %p89
      %p91 = scmp.ne.s32.totalorder %s83, %s85
      %p92 = scmp.eq.s32.totalorder %s33, 1
      %p93 = por %p91, %p92
      %p94 = scmp.ne.s32.totalorder %s85, %s86
      %p95 = scmp.eq.s32.totalorder %s33, 0
      %p96 = por %p94, %p95
      %p97 = scmp.ne.s32.totalorder %s85, %s86
      %p98 = scmp.eq.s32.totalorder %s34, 1
      %p99 = por %p97, %p98
      %p101 = scmp.ne.s32.totalorder %s86, %s100
      %p102 = scmp.eq.s32.totalorder %s34, 0
      %p103 = por %p101, %p102
      %s105 = sadd.s32 %s104, 1
      %p108 = scmp.eq.s32.totalorder %s28, 1
      %p109 = scmp.ne.s32.totalorder %s104, %s106
      %p110 = scmp.eq.s32.totalorder %s28, 0
      %p111 = por %p109, %p110
      %p112 = scmp.ne.s32.totalorder %s104, %s106
      %p113 = scmp.eq.s32.totalorder %s33, 1
      %p114 = por %p112, %p113
      %p115 = scmp.ne.s32.totalorder %s106, %s107
      %p116 = scmp.eq.s32.totalorder %s33, 0
      %p117 = por %p115, %p116
      %p118 = scmp.ne.s32.totalorder %s106, %s107
      %p119 = scmp.eq.s32.totalorder %s34, 1
      %p120 = por %p118, %p119
      %p122 = scmp.ne.s32.totalorder %s107, %s121
      %p123 = scmp.eq.s32.totalorder %s34, 0
      %p124 = por %p122, %p123
      %s126 = sadd.s32 %s125, 1
      %p129 = scmp.eq.s32.totalorder %s28, 1
      %p130 = scmp.ne.s32.totalorder %s125, %s127
      %p131 = scmp.eq.s32.totalorder %s28, 0
      %p132 = por %p130, %p131
      %p133 = scmp.ne.s32.totalorder %s125, %s127
      %p134 = scmp.eq.s32.totalorder %s33, 1
      %p135 = por %p133, %p134
      %p136 = scmp.ne.s32.totalorder %s127, %s128
      %p137 = scmp.eq.s32.totalorder %s33, 0
      %p138 = por %p136, %p137
      %p139 = scmp.ne.s32.totalorder %s127, %s128
      %p140 = scmp.eq.s32.totalorder %s34, 1
      %p141 = por %p139, %p140
      %p143 = scmp.ne.s32.totalorder %s128, %s142
      %p144 = scmp.eq.s32.totalorder %s34, 0
      %p145 = por %p143, %p144
      %s147 = sadd.s32 %s146, 1
      %p150 = scmp.eq.s32.totalorder %s28, 1
      %p151 = scmp.ne.s32.totalorder %s146, %s148
      %p152 = scmp.eq.s32.totalorder %s28, 0
      %p153 = por %p151, %p152
      %p154 = scmp.ne.s32.totalorder %s146, %s148
      %p155 = scmp.eq.s32.totalorder %s33, 1
      %p156 = por %p154, %p155
      %p157 = scmp.ne.s32.totalorder %s148, %s149
      %p158 = scmp.eq.s32.totalorder %s33, 0
      %p159 = por %p157, %p158
      %p160 = scmp.ne.s32.totalorder %s148, %s149
      %p161 = scmp.eq.s32.totalorder %s34, 1
      %p162 = por %p160, %p161
      %p164 = scmp.ne.s32.totalorder %s149, %s163
      %p165 = scmp.eq.s32.totalorder %s34, 0
      %p166 = por %p164, %p165
      %s168 = sadd.s32 %s167, 1
      %p171 = scmp.eq.s32.totalorder %s28, 1
      %p172 = scmp.ne.s32.totalorder %s167, %s169
      %p173 = scmp.eq.s32.totalorder %s28, 0
      %p174 = por %p172, %p173
      %p175 = scmp.ne.s32.totalorder %s167, %s169
      %p176 = scmp.eq.s32.totalorder %s33, 1
      %p177 = por %p175, %p176
      %p178 = scmp.ne.s32.totalorder %s169, %s170
      %p179 = scmp.eq.s32.totalorder %s33, 0
      %p180 = por %p178, %p179
      %p181 = scmp.ne.s32.totalorder %s169, %s170
      %p182 = scmp.eq.s32.totalorder %s34, 1
      %p183 = por %p181, %p182
      %p185 = scmp.ne.s32.totalorder %s170, %s184
      %p186 = scmp.eq.s32.totalorder %s34, 0
      %p187 = por %p185, %p186
      %s189 = sadd.s32 %s188, 1
      %p192 = scmp.eq.s32.totalorder %s28, 1
      %p193 = scmp.ne.s32.totalorder %s188, %s190
      %p194 = scmp.eq.s32.totalorder %s28, 0
      %p195 = por %p193, %p194
      %p196 = scmp.ne.s32.totalorder %s188, %s190
      %p197 = scmp.eq.s32.totalorder %s33, 1
      %p198 = por %p196, %p197
      %p199 = scmp.ne.s32.totalorder %s190, %s191
      %p200 = scmp.eq.s32.totalorder %s33, 0
      %p201 = por %p199, %p200
      %p202 = scmp.ne.s32.totalorder %s190, %s191
      %p203 = scmp.eq.s32.totalorder %s34, 1
      %p204 = por %p202, %p203
      %p206 = scmp.ne.s32.totalorder %s191, %s205
      %p207 = scmp.eq.s32.totalorder %s34, 0
      %p208 = por %p206, %p207
      %s210 = sadd.s32 %s209, 1
      %p213 = scmp.eq.s32.totalorder %s28, 1
      %p214 = scmp.ne.s32.totalorder %s209, %s211
      %p215 = scmp.eq.s32.totalorder %s28, 0
      %p216 = por %p214, %p215
      %p217 = scmp.ne.s32.totalorder %s209, %s211
      %p218 = scmp.eq.s32.totalorder %s33, 1
      %p219 = por %p217, %p218
      %p220 = scmp.ne.s32.totalorder %s211, %s212
      %p221 = scmp.eq.s32.totalorder %s33, 0
      %p222 = por %p220, %p221
      %p223 = scmp.ne.s32.totalorder %s211, %s212
      %p224 = scmp.eq.s32.totalorder %s34, 1
      %p225 = por %p223, %p224
      %p227 = scmp.ne.s32.totalorder %s212, %s226
      %p228 = scmp.eq.s32.totalorder %s34, 0
      %p229 = por %p227, %p228
      %s230 = ssub.s32 %s28, %s35
      %p231 = scmp.eq.s32.totalorder %s230, 0
      %s233 = sadd.s32 %s232, 1
      %s234 = scalar_select %p231, %s232, %s233
      %p237 = pneg %p231
      %p238 = scmp.eq.s32.totalorder %s28, 1
      %p239 = por %p237, %p238
      %p240 = scmp.ne.s32.totalorder %s232, %s235
      %p241 = scmp.eq.s32.totalorder %s28, 0
      %p242 = por %p240, %p241
      %p243 = scmp.ne.s32.totalorder %s232, %s235
      %p244 = scmp.eq.s32.totalorder %s33, 1
      %p245 = por %p243, %p244
      %p246 = scmp.ne.s32.totalorder %s235, %s236
      %p247 = scmp.eq.s32.totalorder %s33, 0
      %p248 = por %p246, %p247
      %p249 = scmp.ne.s32.totalorder %s235, %s236
      %p250 = scmp.eq.s32.totalorder %s34, 1
      %p251 = por %p249, %p250
      %p253 = scmp.ne.s32.totalorder %s236, %s252
      %p254 = scmp.eq.s32.totalorder %s34, 0
      %p255 = por %p253, %p254
      %s256 = ssub.s32 %s28, %s35
      %p257 = scmp.eq.s32.totalorder %s256, 0
      %s259 = sadd.s32 %s258, 1
      %s260 = scalar_select %p257, %s258, %s259
      %p263 = pneg %p257
      %p264 = scmp.eq.s32.totalorder %s28, 1
      %p265 = por %p263, %p264
      %p266 = scmp.ne.s32.totalorder %s258, %s261
      %p267 = scmp.eq.s32.totalorder %s28, 0
      %p268 = por %p266, %p267
      %p269 = scmp.ne.s32.totalorder %s258, %s261
      %p270 = scmp.eq.s32.totalorder %s33, 1
      %p271 = por %p269, %p270
      %p272 = scmp.ne.s32.totalorder %s261, %s262
      %p273 = scmp.eq.s32.totalorder %s33, 0
      %p274 = por %p272, %p273
      %p275 = scmp.ne.s32.totalorder %s261, %s262
      %p276 = scmp.eq.s32.totalorder %s34, 1
      %p277 = por %p275, %p276
      %p279 = scmp.ne.s32.totalorder %s262, %s278
      %p280 = scmp.eq.s32.totalorder %s34, 0
      %p281 = por %p279, %p280
      %s282 = ssub.s32 %s28, %s35
      %p283 = scmp.eq.s32.totalorder %s282, 0
      %s285 = sadd.s32 %s284, 1
      %s286 = scalar_select %p283, %s284, %s285
      %p289 = pneg %p283
      %p290 = scmp.eq.s32.totalorder %s28, 1
      %p291 = por %p289, %p290
      %p292 = scmp.ne.s32.totalorder %s284, %s287
      %p293 = scmp.eq.s32.totalorder %s28, 0
      %p294 = por %p292, %p293
      %p295 = scmp.ne.s32.totalorder %s284, %s287
      %p296 = scmp.eq.s32.totalorder %s33, 1
      %p297 = por %p295, %p296
      %p298 = scmp.ne.s32.totalorder %s287, %s288
      %p299 = scmp.eq.s32.totalorder %s33, 0
      %p300 = por %p298, %p299
      %p301 = scmp.ne.s32.totalorder %s287, %s288
      %p302 = scmp.eq.s32.totalorder %s34, 1
      %p303 = por %p301, %p302
      %p305 = scmp.ne.s32.totalorder %s288, %s304
      %p306 = scmp.eq.s32.totalorder %s34, 0
      %p307 = por %p305, %p306
      %p308 = scmp.le.s32.totalorder 1, %s28
      %p309 = scmp.lt.s32.totalorder %s28, 3
      %p310 = pnand %p308, %p309
      %p311 = pneg %p310
      // Predicated region
      $region9: #{tpu_custom_call.1} parent=5 // pred_check
        _
      $region10: #{tpu_custom_call.1} parent=5 // pred_check_branch
        %313 = sbr.rel (%p310) target = $region12
      $region11: #{tpu_custom_call.1} parent=5 // pred_region
        %s314 = ssub.s32 %s28, 1
        // Predicated region
        $region13: #{tpu_custom_call.1} parent=11 // pred_check
          %p315 = pneg %p75
        $region14: #{tpu_custom_call.1} parent=11 // pred_check_branch
          %317 = sbr.rel (%p315) target = $region16
        $region15: #{tpu_custom_call.1} parent=11 // pred_region
          %s319 = ssub.s32 256, 256
          %320 = vsyncadd [#allocation6], %s319
          %s321 = sshll.u32 [#allocation5], 4
          %s322 = int_to_ptr.vmem [resolvable:$true] %s321
          %327 = dma.hbm_to_vmem [thread:$0]  %s1, 256, %s322, [#allocation6], 64, 64, 4
        $region16: #{tpu_custom_call.1} parent=11 // pred_fallthru
          _
        // Predicated region
        $region17: #{tpu_custom_call.1} parent=11 // pred_check
          %p328 = pneg %p96
        $region18: #{tpu_custom_call.1} parent=11 // pred_check_branch
          %330 = sbr.rel (%p328) target = $region20
        $region19: #{tpu_custom_call.1} parent=11 // pred_region
          _
        $region20: #{tpu_custom_call.1} parent=11 // pred_fallthru
          _
        // Predicated region
        $region21: #{tpu_custom_call.1} parent=11 // pred_check
          %p331 = pneg %p117
        $region22: #{tpu_custom_call.1} parent=11 // pred_check_branch
          %333 = sbr.rel (%p331) target = $region24
        $region23: #{tpu_custom_call.1} parent=11 // pred_region
          _
        $region24: #{tpu_custom_call.1} parent=11 // pred_fallthru
          _
        // Predicated region
        $region25: #{tpu_custom_call.1} parent=11 // pred_check
          %p334 = pneg %p138
        $region26: #{tpu_custom_call.1} parent=11 // pred_check_branch
          %336 = sbr.rel (%p334) target = $region28
        $region27: #{tpu_custom_call.1} parent=11 // pred_region
          _
        $region28: #{tpu_custom_call.1} parent=11 // pred_fallthru
          _
        // Predicated region
        $region29: #{tpu_custom_call.1} parent=11 // pred_check
          %p337 = pneg %p159
        $region30: #{tpu_custom_call.1} parent=11 // pred_check_branch
          %339 = sbr.rel (%p337) target = $region32
        $region31: #{tpu_custom_call.1} parent=11 // pred_region
          _
        $region32: #{tpu_custom_call.1} parent=11 // pred_fallthru
          _
        // Predicated region
        $region33: #{tpu_custom_call.1} parent=11 // pred_check
          %p340 = pneg %p180
        $region34: #{tpu_custom_call.1} parent=11 // pred_check_branch
          %342 = sbr.rel (%p340) target = $region36
        $region35: #{tpu_custom_call.1} parent=11 // pred_region
          _
        $region36: #{tpu_custom_call.1} parent=11 // pred_fallthru
          _
        // Predicated region
        $region37: #{tpu_custom_call.1} parent=11 // pred_check
          %p343 = pneg %p201
        $region38: #{tpu_custom_call.1} parent=11 // pred_check_branch
          %345 = sbr.rel (%p343) target = $region40
        $region39: #{tpu_custom_call.1} parent=11 // pred_region
          _
        $region40: #{tpu_custom_call.1} parent=11 // pred_fallthru
          _
        // Predicated region
        $region41: #{tpu_custom_call.1} parent=11 // pred_check
          %p346 = pneg %p222
        $region42: #{tpu_custom_call.1} parent=11 // pred_check_branch
          %348 = sbr.rel (%p346) target = $region44
        $region43: #{tpu_custom_call.1} parent=11 // pred_region
          _
        $region44: #{tpu_custom_call.1} parent=11 // pred_fallthru
          _
      $region12: #{tpu_custom_call.1} parent=5 // pred_fallthru
        _
      %p349 = scmp.lt.s32.totalorder %s28, 2
      // Predicated region
      $region45: #{tpu_custom_call.1} parent=5 // pred_check
        %p350 = pneg %p349
      $region46: #{tpu_custom_call.1} parent=5 // pred_check_branch
        %352 = sbr.rel (%p350) target = $region48
      $region47: #{tpu_custom_call.1} parent=5 // pred_region
        // Predicated region
        $region49: #{tpu_custom_call.1} parent=47 // pred_check
          %p353 = pneg %p48
        $region50: #{tpu_custom_call.1} parent=47 // pred_check_branch
          %355 = sbr.rel (%p353) target = $region52
        $region51: #{tpu_custom_call.1} parent=47 // pred_region
          %s356 = sand.u32 %s38, 1
          %s357 = scalar_lea.sflag [#allocation3], %s356
          %s358 = sand.u32 %s38, 1
          %s359 = smul.addr %s358, 8
          %s360 = scalar_lea.vmem [#allocation2], %s359
          %s362 = ssub.s32 128, 128
          %363 = vsyncadd %s357, %s362
          %s364 = smul.addr %s28, 128
          %s365 = scalar_lea.hbm %s0, %s364
          %s367 = sshll.u32 %s360, 4
          %s368 = int_to_ptr.vmem [resolvable:$true] %s367
          %370 = dma.hbm_to_vmem [thread:$0]  %s365, 128, %s368, %s357
        $region52: #{tpu_custom_call.1} parent=47 // pred_fallthru
          _
      $region48: #{tpu_custom_call.1} parent=5 // pred_fallthru
        _
      %p371 = scmp.le.s32.totalorder 1, %s28
      %p372 = scmp.lt.s32.totalorder %s28, 3
      %p373 = pnand %p371, %p372
      %p374 = pneg %p373
      // Predicated region
      $region53: #{tpu_custom_call.1} parent=5 // pred_check
        _
      $region54: #{tpu_custom_call.1} parent=5 // pred_check_branch
        %376 = sbr.rel (%p373) target = $region56
      $region55: #{tpu_custom_call.1} parent=5 // pred_region
        %s377 = ssub.s32 %s28, 1
        %s378 = sand.u32 %s41, 1
        %s379 = scalar_lea.sflag [#allocation3], %s378
        %s380 = sand.u32 %s41, 1
        %s381 = smul.addr %s380, 8
        %s382 = scalar_lea.vmem [#allocation2], %s381
        // Predicated region
        $region57: #{tpu_custom_call.1} parent=55 // pred_check
          %p383 = pneg %p54
        $region58: #{tpu_custom_call.1} parent=55 // pred_check_branch
          %385 = sbr.rel (%p383) target = $region60
        $region59: #{tpu_custom_call.1} parent=55 // pred_region
          %386 = dma.done %s379, 128
        $region60: #{tpu_custom_call.1} parent=55 // pred_fallthru
          _
        // Predicated region
        $region61: #{tpu_custom_call.1} parent=55 // pred_check
          %p387 = pneg %p75
        $region62: #{tpu_custom_call.1} parent=55 // pred_check_branch
          %389 = sbr.rel (%p387) target = $region64
        $region63: #{tpu_custom_call.1} parent=55 // pred_region
          %390 = dma.done [#allocation6], 256
        $region64: #{tpu_custom_call.1} parent=55 // pred_fallthru
          _
        %s391 = sand.u32 %s41, 1
        %s392 = scalar_lea.sflag [#allocation3], %s391
        %s393 = sand.u32 %s41, 1
        %s394 = smul.addr %s393, 8
        %s395 = scalar_lea.vmem [#allocation2], %s394
        %p396 = pneg %p54
        %p397 = pneg %p51
        %p398 = pneg %p75
        %p399 = pneg %p72
        %p400 = pneg %p96
        %p401 = pneg %p93
        %p402 = pneg %p117
        %p403 = pneg %p114
        %p404 = pneg %p138
        %p405 = pneg %p135
        %p406 = pneg %p159
        %p407 = pneg %p156
        %p408 = pneg %p180
        %p409 = pneg %p177
        %p410 = pneg %p201
        %p411 = pneg %p198
        %p412 = pneg %p222
        %p413 = pneg %p219
        %p414 = pneg %p248
        %p415 = pneg %p245
        %s416 = sand.u32 %s235, 1
        %s417 = scalar_lea.sflag [#allocation4], %s416
        %s418 = sand.u32 %s235, 1
        %s419 = smul.addr %s418, 8
        %s420 = scalar_lea.vmem [#allocation7], %s419
        %p421 = pneg %p274
        %p422 = pneg %p271
        %s423 = sand.u32 %s33, 1
        %s424 = scalar_lea.sflag [#allocation9], %s423
        %s425 = sand.u32 %s261, 1
        %s426 = smul.addr %s425, 8
        %s427 = scalar_lea.vmem [#allocation8], %s426
        %p428 = pneg %p300
        %p429 = pneg %p297
        %s430 = sand.u32 %s33, 1
        %s431 = scalar_lea.sflag [#allocation9], %s430
        %s432 = sand.u32 %s287, 1
        %s433 = smul.addr %s432, 8
        %s434 = scalar_lea.vmem [#allocation10], %s433
        %v436 = vld [vmem:[%s382] sm:$0xff]
        %v437 = vld [vmem:[#allocation5] sm:$0xf]
        %v438 = vld [vmem:[#allocation5 + $0x4] sm:$0xf]
        %v439 = vld [vmem:[#allocation5 + $0x8] sm:$0xf]
        %v440 = vld [vmem:[#allocation5 + $0xc] sm:$0xf]
        %v441 = vpack.c.bf16 %v436, %v436
        %v442 = vld [vmem:[%s2] sm:$0x1]
        %v444 = vlaneseq
        %v445 = vshrl.u32 %v444, 7
        %v446 = vsub.s32 0, %v445
        %v447 = vrot.slane %v442, %v446
        %v453 = vunpack.c.l.b16 %v437
        %v454 = vunpack.c.l.b16 %v438
        %v455 = vunpack.c.l.b16 %v439
        %v456 = vunpack.c.l.b16 %v440
        %v457 = vpack.c.b16 %v454, %v453
        %v458 = vpack.c.b16 %v456, %v455
        %vm461 = vcmask 261120
        %v463 = vsel %vm461, %v441, 0
        %465 = vmatprep.subr.bf16.mxu0 0
        %466 = vmatpush1.bf16.msra.mxu0 %v457
        %467 = vmatprep.subr.bf16.mxu0 0
        %468 = vmatpush1.bf16.msra.mxu0 %v458
        %469 = vmatprep.subr.bf16.mxu0 0
        %470 = vmatpush1.bf16.msra.mxu0 0
        %471 = vmatprep.subr.bf16.mxu0 0
        %472 = vmatpush1.bf16.msra.mxu0 0
        %473 = vmatprep.subr.bf16.mxu0 0
        %474 = vmatpush1.bf16.msra.mxu0 0
        %475 = vmatprep.subr.bf16.mxu0 0
        %476 = vmatpush1.bf16.msra.mxu0 0
        %477 = vmatprep.subr.bf16.mxu0 0
        %478 = vmatpush1.bf16.msra.mxu0 0
        %479 = vmatprep.subr.bf16.mxu0 0
        %480 = vmatpush1.bf16.msra.mxu0 0
        %481 = vmatprep.subr.bf16.mxu0 0
        %482 = vmatpush1.bf16.msra.mxu0 0
        %483 = vmatprep.subr.bf16.mxu0 0
        %484 = vmatpush1.bf16.msra.mxu0 0
        %485 = vmatprep.subr.bf16.mxu0 0
        %486 = vmatpush1.bf16.msra.mxu0 0
        %487 = vmatprep.subr.bf16.mxu0 0
        %488 = vmatpush1.bf16.msra.mxu0 0
        %489 = vmatprep.subr.bf16.mxu0 0
        %490 = vmatpush1.bf16.msra.mxu0 0
        %491 = vmatprep.subr.bf16.mxu0 0
        %492 = vmatpush1.bf16.msra.mxu0 0
        %493 = vmatprep.subr.bf16.mxu0 0
        %494 = vmatpush1.bf16.msra.mxu0 0
        %495 = vmatprep.subr.bf16.mxu0 0
        %496 = vmatpush1.bf16.msra.mxu0 0
        %497 = vmatprep.mubr.bf16.mxu0 0
        %498 = vmatmul.mubr.bf16.gmra.mrb[0].mxu0 %v463
        %v499 = vpop.f32.mrb[0].mxu0
        %v500 = vadd.f32 %v447, %v499
        %v501 = vpop.f32.mrb[0].mxu0
        %v502 = vpop.f32.mrb[0].mxu0
        %v503 = vpop.f32.mrb[0].mxu0
        %504 = vdwg.mxu0
        %v505 = vld [vmem:[%s3] sm:$0x1]
        %v506 = vld [vmem:[%s4] sm:$0x1]
        %v507 = vsel %vm461, %v500, 0.0
        %508 = vadd.xlane.f32.xlu0 %v507
        %v509 = vpop.xlane.xlu0 %508
        %v510 = vrcp.pop 32.0
        %v511 = vmul.f32 %v509, %v510
        %v512 = vmul.f32 %v500, %v500
        %v513 = vsel %vm461, %v512, 0.0
        %514 = vadd.xlane.f32.xlu0 %v513
        %v515 = vpop.xlane.xlu0 %514
        %v516 = vmul.f32 %v515, %v510
        %v517 = vmul.f32 %v511, %v511
        %v518 = vsub.f32 %v516, %v517
        %v519 = vmax.f32 %v518, 0.0
        %v520 = vsub.f32 %v500, %v511
        %v521 = vadd.f32 %v519, 1e-05
        %v522 = vrsqrt.pop %v521
        %v523 = vmul.f32 %v520, %v522
        %v525 = vlaneseq
        %v526 = vshrl.u32 %v525, 7
        %v527 = vsub.s32 0, %v526
        %v528 = vrot.slane %v505, %v527
        %v530 = vmul.f32 %v523, %v528
        %v532 = vlaneseq
        %v533 = vshrl.u32 %v532, 7
        %v534 = vsub.s32 0, %v533
        %v535 = vrot.slane %v506, %v534
        %v537 = vadd.f32 %v530, %v535
        %v538 = vmax.f32 %v537, 0.0
        %v539 = vld [vmem:[%s5] sm:$0x1]
        %v540 = vld [vmem:[%s6] sm:$0x1]
        %542 = vrot.lane.b32.xlu0 %v500, 96
        %v543 = vpop.permute.xlu0 %542
        %v545 = vsel %vm461, %v543, 0.0
        %546 = vadd.xlane.f32.xlu0 %v545
        %v547 = vpop.xlane.xlu0 %546
        %v548 = vmul.f32 %v547, %v510
        %550 = vrot.lane.b32.xlu0 %v512, 96
        %v551 = vpop.permute.xlu0 %550
        %v553 = vsel %vm461, %v551, 0.0
        %554 = vadd.xlane.f32.xlu0 %v553
        %v555 = vpop.xlane.xlu0 %554
        %v556 = vmul.f32 %v555, %v510
        %v557 = vmul.f32 %v548, %v548
        %v558 = vsub.f32 %v556, %v557
        %v559 = vmax.f32 %v558, 0.0
        %v560 = vsub.f32 %v500, %v548
        %v561 = vadd.f32 %v559, 1e-05
        %v562 = vrsqrt.pop %v561
        %v563 = vmul.f32 %v560, %v562
        %v565 = vlaneseq
        %v566 = vshrl.u32 %v565, 7
        %v567 = vsub.s32 0, %v566
        %v568 = vrot.slane %v539, %v567
        %569 = vrot.lane.b32.xlu0 %v568, 32
        %v570 = vpop.permute.xlu0 %569
        %v572 = vmul.f32 %v563, %v570
        %v574 = vlaneseq
        %v575 = vshrl.u32 %v574, 7
        %v576 = vsub.s32 0, %v575
        %v577 = vrot.slane %v540, %v576
        %578 = vrot.lane.b32.xlu0 %v577, 32
        %v579 = vpop.permute.xlu0 %578
        %v581 = vadd.f32 %v572, %v579
        %v582 = vmax.f32 %v581, 0.0
        %583 = vrot.lane.b32.xlu0 %v500, 64
        %v584 = vpop.permute.xlu0 %583
        %586 = vst.msk [vmem:[%s434] sm:$0xff] %vm461, %v584
        %v587 = vld [vmem:[%s7] sm:$0xf]
        %v588 = vld [vmem:[%s7 + $0x4] sm:$0xf]
        %v589 = vld [vmem:[%s7 + $0x8] sm:$0xf]
        %v590 = vld [vmem:[%s7 + $0xc] sm:$0xf]
        %v591 = vpack.c.bf16 %v538, %v538
        %v596 = vunpack.c.l.b16 %v587
        %v597 = vunpack.c.l.b16 %v588
        %v598 = vunpack.c.l.b16 %v589
        %v599 = vunpack.c.l.b16 %v590
        %v600 = vpack.c.b16 %v597, %v596
        %v601 = vpack.c.b16 %v599, %v598
        %v605 = vsel %vm461, %v591, 0
        %607 = vmatprep.subr.bf16.mxu0 0
        %608 = vmatpush1.bf16.msra.mxu0 %v600
        %609 = vmatprep.subr.bf16.mxu0 0
        %610 = vmatpush1.bf16.msra.mxu0 %v601
        %611 = vmatprep.subr.bf16.mxu0 0
        %612 = vmatpush1.bf16.msra.mxu0 0
        %613 = vmatprep.subr.bf16.mxu0 0
        %614 = vmatpush1.bf16.msra.mxu0 0
        %615 = vmatprep.subr.bf16.mxu0 0
        %616 = vmatpush1.bf16.msra.mxu0 0
        %617 = vmatprep.subr.bf16.mxu0 0
        %618 = vmatpush1.bf16.msra.mxu0 0
        %619 = vmatprep.subr.bf16.mxu0 0
        %620 = vmatpush1.bf16.msra.mxu0 0
        %621 = vmatprep.subr.bf16.mxu0 0
        %622 = vmatpush1.bf16.msra.mxu0 0
        %623 = vmatprep.subr.bf16.mxu0 0
        %624 = vmatpush1.bf16.msra.mxu0 0
        %625 = vmatprep.subr.bf16.mxu0 0
        %626 = vmatpush1.bf16.msra.mxu0 0
        %627 = vmatprep.subr.bf16.mxu0 0
        %628 = vmatpush1.bf16.msra.mxu0 0
        %629 = vmatprep.subr.bf16.mxu0 0
        %630 = vmatpush1.bf16.msra.mxu0 0
        %631 = vmatprep.subr.bf16.mxu0 0
        %632 = vmatpush1.bf16.msra.mxu0 0
        %633 = vmatprep.subr.bf16.mxu0 0
        %634 = vmatpush1.bf16.msra.mxu0 0
        %635 = vmatprep.subr.bf16.mxu0 0
        %636 = vmatpush1.bf16.msra.mxu0 0
        %637 = vmatprep.subr.bf16.mxu0 0
        %638 = vmatpush1.bf16.msra.mxu0 0
        %639 = vmatprep.mubr.bf16.mxu0 0
        %640 = vmatmul.mubr.bf16.gmra.mrb[0].mxu0 %v605
        %v641 = vpop.f32.mrb[0].mxu0
        %v642 = vadd.f32 0.0, %v641
        %v643 = vpop.f32.mrb[0].mxu0
        %v644 = vpop.f32.mrb[0].mxu0
        %v645 = vpop.f32.mrb[0].mxu0
        %646 = vdwg.mxu0
        %647 = vst.msk [vmem:[%s420] sm:$0xff] %vm461, %v642
        %v648 = vld [vmem:[%s7] sm:$0xf]
        %v649 = vld [vmem:[%s7 + $0x4] sm:$0xf]
        %v650 = vld [vmem:[%s7 + $0x8] sm:$0xf]
        %v651 = vld [vmem:[%s7 + $0xc] sm:$0xf]
        %v652 = vpack.c.bf16 %v582, %v582
        %v653 = vld [vmem:[%s8] sm:$0x1]
        %v655 = vlaneseq
        %v656 = vshrl.u32 %v655, 7
        %v657 = vsub.s32 0, %v656
        %v658 = vrot.slane %v653, %v657
        %661 = vrot.lane.b32.xlu0 %v652, 96
        %v662 = vpop.permute.xlu0 %661
        %v667 = vunpack.c.l.b16 %v648
        %v668 = vunpack.c.l.b16 %v649
        %v669 = vunpack.c.l.b16 %v650
        %v670 = vunpack.c.l.b16 %v651
        %v671 = vpack.c.b16 %v668, %v667
        %v672 = vpack.c.b16 %v670, %v669
        %v676 = vsel %vm461, %v662, 0
        %678 = vmatprep.subr.bf16.mxu0 0
        %679 = vmatpush1.bf16.msra.mxu0 %v671
        %680 = vmatprep.subr.bf16.mxu0 0
        %681 = vmatpush1.bf16.msra.mxu0 %v672
        %682 = vmatprep.subr.bf16.mxu0 0
        %683 = vmatpush1.bf16.msra.mxu0 0
        %684 = vmatprep.subr.bf16.mxu0 0
        %685 = vmatpush1.bf16.msra.mxu0 0
        %686 = vmatprep.subr.bf16.mxu0 0
        %687 = vmatpush1.bf16.msra.mxu0 0
        %688 = vmatprep.subr.bf16.mxu0 0
        %689 = vmatpush1.bf16.msra.mxu0 0
        %690 = vmatprep.subr.bf16.mxu0 0
        %691 = vmatpush1.bf16.msra.mxu0 0
        %692 = vmatprep.subr.bf16.mxu0 0
        %693 = vmatpush1.bf16.msra.mxu0 0
        %694 = vmatprep.subr.bf16.mxu0 0
        %695 = vmatpush1.bf16.msra.mxu0 0
        %696 = vmatprep.subr.bf16.mxu0 0
        %697 = vmatpush1.bf16.msra.mxu0 0
        %698 = vmatprep.subr.bf16.mxu0 0
        %699 = vmatpush1.bf16.msra.mxu0 0
        %700 = vmatprep.subr.bf16.mxu0 0
        %701 = vmatpush1.bf16.msra.mxu0 0
        %702 = vmatprep.subr.bf16.mxu0 0
        %703 = vmatpush1.bf16.msra.mxu0 0
        %704 = vmatprep.subr.bf16.mxu0 0
        %705 = vmatpush1.bf16.msra.mxu0 0
        %706 = vmatprep.subr.bf16.mxu0 0
        %707 = vmatpush1.bf16.msra.mxu0 0
        %708 = vmatprep.subr.bf16.mxu0 0
        %709 = vmatpush1.bf16.msra.mxu0 0
        %710 = vmatprep.mubr.bf16.mxu0 0
        %711 = vmatmul.mubr.bf16.gmra.mrb[0].mxu0 %v676
        %v712 = vpop.f32.mrb[0].mxu0
        %v713 = vadd.f32 %v658, %v712
        %v714 = vpop.f32.mrb[0].mxu0
        %v715 = vpop.f32.mrb[0].mxu0
        %v716 = vpop.f32.mrb[0].mxu0
        %717 = vdwg.mxu0
        %718 = vst.msk [vmem:[%s427] sm:$0xff] %vm461, %v713
        %s719 = sand.u32 %s235, 1
        %s720 = scalar_lea.sflag [#allocation4], %s719
        %s721 = sand.u32 %s235, 1
        %s722 = smul.addr %s721, 8
        %s723 = scalar_lea.vmem [#allocation7], %s722
        %s724 = sand.u32 %s33, 1
        %s725 = scalar_lea.sflag [#allocation9], %s724
        %s726 = sand.u32 %s261, 1
        %s727 = smul.addr %s726, 8
        %s728 = scalar_lea.vmem [#allocation8], %s727
        %s729 = sand.u32 %s33, 1
        %s730 = scalar_lea.sflag [#allocation9], %s729
        %s731 = sand.u32 %s287, 1
        %s732 = smul.addr %s731, 8
        %s733 = scalar_lea.vmem [#allocation10], %s732
        // Predicated region
        $region65: #{tpu_custom_call.1} parent=55 // pred_check
          %p734 = pneg %p245
        $region66: #{tpu_custom_call.1} parent=55 // pred_check_branch
          %736 = sbr.rel (%p734) target = $region68
        $region67: #{tpu_custom_call.1} parent=55 // pred_region
          %s738 = ssub.s32 128, 128
          %739 = vsyncadd %s720, %s738
          %s740 = smul.addr %s33, 128
          %s741 = scalar_lea.hbm %s9, %s740
          %s743 = sshll.u32 %s723, 4
          %s744 = int_to_ptr.vmem [resolvable:$true] %s743
          %746 = dma.vmem_to_hbm [thread:$0]  %s744, 128, %s741, %s720
        $region68: #{tpu_custom_call.1} parent=55 // pred_fallthru
          _
        // Predicated region
        $region69: #{tpu_custom_call.1} parent=55 // pred_check
          %p747 = pneg %p271
        $region70: #{tpu_custom_call.1} parent=55 // pred_check_branch
          %749 = sbr.rel (%p747) target = $region72
        $region71: #{tpu_custom_call.1} parent=55 // pred_region
          %s751 = ssub.s32 128, 128
          %752 = vsyncadd %s725, %s751
          %s753 = smul.addr %s33, 128
          %s754 = scalar_lea.hbm %s10, %s753
          %s756 = sshll.u32 %s728, 4
          %s757 = int_to_ptr.vmem [resolvable:$true] %s756
          %759 = dma.vmem_to_hbm [thread:$0]  %s757, 128, %s754, %s725
        $region72: #{tpu_custom_call.1} parent=55 // pred_fallthru
          _
        // Predicated region
        $region73: #{tpu_custom_call.1} parent=55 // pred_check
          %p760 = pneg %p297
        $region74: #{tpu_custom_call.1} parent=55 // pred_check_branch
          %762 = sbr.rel (%p760) target = $region76
        $region75: #{tpu_custom_call.1} parent=55 // pred_region
          %s764 = ssub.s32 128, 128
          %765 = vsyncadd %s730, %s764
          %s766 = smul.addr %s33, 128
          %s767 = scalar_lea.hbm %s11, %s766
          %s769 = sshll.u32 %s733, 4
          %s770 = int_to_ptr.vmem [resolvable:$true] %s769
          %772 = dma.vmem_to_hbm [thread:$0]  %s770, 128, %s767, %s730
        $region76: #{tpu_custom_call.1} parent=55 // pred_fallthru
          _
      $region56: #{tpu_custom_call.1} parent=5 // pred_fallthru
        _
      %p773 = scmp.le.s32.totalorder 2, %s28
      // Predicated region
      $region77: #{tpu_custom_call.1} parent=5 // pred_check
        %p774 = pneg %p773
      $region78: #{tpu_custom_call.1} parent=5 // pred_check_branch
        %776 = sbr.rel (%p774) target = $region80
      $region79: #{tpu_custom_call.1} parent=5 // pred_region
        %s777 = ssub.s32 %s28, 2
        // Predicated region
        $region81: #{tpu_custom_call.1} parent=79 // pred_check
          %p778 = pneg %p251
        $region82: #{tpu_custom_call.1} parent=79 // pred_check_branch
          %780 = sbr.rel (%p778) target = $region84
        $region83: #{tpu_custom_call.1} parent=79 // pred_region
          %s781 = sand.u32 %s236, 1
          %s782 = scalar_lea.sflag [#allocation4], %s781
          %s783 = sand.u32 %s236, 1
          %s784 = smul.addr %s783, 8
          %s785 = scalar_lea.vmem [#allocation7], %s784
          %786 = dma.done %s782, 128
        $region84: #{tpu_custom_call.1} parent=79 // pred_fallthru
          _
        // Predicated region
        $region85: #{tpu_custom_call.1} parent=79 // pred_check
          %p787 = pneg %p277
        $region86: #{tpu_custom_call.1} parent=79 // pred_check_branch
          %789 = sbr.rel (%p787) target = $region88
        $region87: #{tpu_custom_call.1} parent=79 // pred_region
          %s790 = sand.u32 %s34, 1
          %s791 = scalar_lea.sflag [#allocation9], %s790
          %s792 = sand.u32 %s262, 1
          %s793 = smul.addr %s792, 8
          %s794 = scalar_lea.vmem [#allocation8], %s793
          %795 = dma.done %s791, 128
        $region88: #{tpu_custom_call.1} parent=79 // pred_fallthru
          _
        // Predicated region
        $region89: #{tpu_custom_call.1} parent=79 // pred_check
          %p796 = pneg %p303
        $region90: #{tpu_custom_call.1} parent=79 // pred_check_branch
          %798 = sbr.rel (%p796) target = $region92
        $region91: #{tpu_custom_call.1} parent=79 // pred_region
          %s799 = sand.u32 %s34, 1
          %s800 = scalar_lea.sflag [#allocation9], %s799
          %s801 = sand.u32 %s288, 1
          %s802 = smul.addr %s801, 8
          %s803 = scalar_lea.vmem [#allocation10], %s802
          %804 = dma.done %s800, 128
        $region92: #{tpu_custom_call.1} parent=79 // pred_fallthru
          _
      $region80: #{tpu_custom_call.1} parent=5 // pred_fallthru
        _
    $region6: #{tpu_custom_call.1} parent=1 // loop_footer
      %s32 = sadd.s32 1, %s28
    $region7: #{tpu_custom_call.1} parent=1 // loop_footer_branch
      %27 = sbr.rel target = $region3
    $region8: #{tpu_custom_call.1} parent=1 // loop_exit
      _
    %805 = vsyncpa [#allocation3], 1
    %s806 = scalar_lea.sflag [#allocation3], 1
    %807 = vsyncpa %s806, 1
    %808 = vsyncpa [#allocation6], 1
    %809 = vsyncpa [#allocation4], 1
    %s810 = scalar_lea.sflag [#allocation4], 1
    %811 = vsyncpa %s810, 1
    %812 = vsyncpa [#allocation9], 1
    %s813 = scalar_lea.sflag [#allocation9], 1
    %814 = vsyncpa %s813, 1

</llo_original>
